<compile_context>
chip_gen: v6e
topology: v6e:2x2x1
jax: 0.10.0
libtpu: 0.0.40
codegen_flags: <defaults>
</compile_context>

<pallas_src>
import jax
import jax.numpy as jnp
from jax.experimental import pallas as pl
from jax.experimental.pallas import tpu as pltpu


def _round_up(x: int, m: int) -> int:
    return ((x + m - 1) // m) * m


def _proj_matmul_kernel(x_ref, w_ref, o_ref):
    # Hot path: one (TM, K) x (K, TN) MXU matmul per grid step, fp32 accumulation.
    o_ref[...] = jnp.dot(
        x_ref[...], w_ref[...], preferred_element_type=jnp.float32
    ).astype(o_ref.dtype)


def _vmem_budget_and_tm_max():
    """Per-generation VMEM budget (bytes) and max TM rows.

    v5e/v6e have 128 MiB physical VMEM -> allow TM up to 2048 and a large
    scoped budget. v7x (64 MiB per TensorCore) and unknown chips get the
    conservative config (TM<=1024, budget < 48 MiB preserves double-buffering).
    """
    try:
        info = pltpu.get_tpu_info()
        cap = int(getattr(info, "vmem_capacity_bytes", 64 << 20))
    except Exception:
        cap = 64 << 20
    if cap >= (96 << 20):
        return 88 << 20, 2048
    return 44 << 20, 1024


def _projection_matmul(x_rows, w_mat, out_dtype):
    """(M, K) @ (K, N) -> (M, N), tiled Pallas matmul (K kept whole per block)."""
    m, k = x_rows.shape
    k2, n = w_mat.shape
    assert k == k2, (x_rows.shape, w_mat.shape)

    compute_dtype = jnp.bfloat16
    in_bytes = jnp.dtype(compute_dtype).itemsize
    out_bytes = jnp.dtype(out_dtype).itemsize

    budget, tm_max = _vmem_budget_and_tm_max()

    # ---- tile sizing ------------------------------------------------------
    # TN lane-dense and covering C_out for typical shortcut widths, so the
    # activation stream is read exactly once (grid_n == 1 for C_out <= 512).
    tn = min(_round_up(n, 128), 512)
    # TM a multiple of 128 (bf16 packs 16 sublanes/vreg; 128 keeps layouts dense).
    tm = min(tm_max, _round_up(m, 128))

    def vmem_need(tm_):
        # double-buffered x, w and out tiles
        return 2 * (tm_ * k * in_bytes + k * tn * in_bytes + tm_ * tn * out_bytes)

    while vmem_need(tm) > budget - (12 << 20) and tm > 128:
        tm //= 2

    # Cast to bf16; with allow_input_fusion the strided-slice/reshape/cast
    # producer can be fused into the kernel's input pipeline (no HBM copy).
    x_c = x_rows.astype(compute_dtype)
    w_c = w_mat.astype(compute_dtype)

    # Only the tiny weight is padded, and only when C_out is not lane-aligned
    # (never for production shortcut widths). M and the big output are never
    # padded: ragged edge blocks are masked by Pallas; K stays whole so no
    # garbage can enter the contraction.
    n_lane = _round_up(n, 128)
    if n_lane != n:
        w_c = jnp.pad(w_c, ((0, 0), (0, n_lane - n)))

    grid_m = pl.cdiv(m, tm)
    grid_n = pl.cdiv(n_lane, tn)
    # M-tiles outer (the large, megacore-sharded axis), N-tiles inner. With
    # grid_n == 1 the weight block index is constant -> DMA'd once, resident.
    grid = (grid_m, grid_n)

    vmem_limit = int(min(max(vmem_need(tm) + (12 << 20), 32 << 20), budget))

    cost = pl.CostEstimate(
        flops=2 * m * k * n,
        transcendentals=0,
        bytes_accessed=(m * k * in_bytes + k * n * in_bytes + m * n * out_bytes),
    )

    out_padded = pl.pallas_call(
        _proj_matmul_kernel,
        out_shape=jax.ShapeDtypeStruct((m, n_lane), out_dtype),
        grid_spec=pltpu.PrefetchScalarGridSpec(
            num_scalar_prefetch=0,
            grid=grid,
            in_specs=[
                pl.BlockSpec((tm, k), lambda mi, ni: (mi, 0)),   # activations (streamed)
                pl.BlockSpec((k, tn), lambda mi, ni: (0, ni)),   # weight (resident)
            ],
            out_specs=pl.BlockSpec((tm, tn), lambda mi, ni: (mi, ni)),
        ),
        compiler_params=pltpu.CompilerParams(
            dimension_semantics=("parallel", "parallel"),
            vmem_limit_bytes=vmem_limit,
            allow_input_fusion=[True, False],
        ),
        cost_estimate=cost,
    )(x_c, w_c)

    if n_lane == n:
        return out_padded
    return out_padded[:, :n]


def full_projection_shortcut_nhwc(x_nhwc, weight_oi11, stride: int, out_dtype=None):
    """NHWC-native path (preferred): avoids any layout transposes around the kernel.

    x_nhwc:      (N, H, W, C_in)
    weight_oi11: (C_out, C_in, 1, 1)  -- PyTorch conv weight layout
    out_dtype:   optional; pass jnp.bfloat16 when feeding the residual add to
                 halve output HBM traffic. Defaults to x_nhwc.dtype.
    returns:     (N, H_out, W_out, C_out)
    """
    n, h, w, c_in = x_nhwc.shape
    c_out = weight_oi11.shape[0]
    out_dtype = x_nhwc.dtype if out_dtype is None else out_dtype

    # Strided spatial subsample == exactly what a 1x1 conv with stride does.
    x_s = x_nhwc[:, ::stride, ::stride, :]
    h_out, w_out = x_s.shape[1], x_s.shape[2]
    x_rows = x_s.reshape(n * h_out * w_out, c_in)

    # (C_out, C_in, 1, 1) -> (C_in, C_out) for right-multiplication.
    w_mat = jnp.transpose(weight_oi11[:, :, 0, 0], (1, 0))

    out_rows = _projection_matmul(x_rows, w_mat, out_dtype)
    return out_rows.reshape(n, h_out, w_out, c_out)


def full_projection_shortcut(x_nchw, weight_oi11, stride: int, out_dtype=None):
    """PyTorch-parity interface: nn.Conv2d(in, out, 1, stride, bias=False) on NCHW.

    The NCHW<->NHWC transposes here are wrapper glue for interface parity; a
    JAX model kept in NHWC should call full_projection_shortcut_nhwc directly
    and avoid both extra HBM passes.
    """
    x_nhwc = jnp.transpose(x_nchw, (0, 2, 3, 1))
    out_nhwc = full_projection_shortcut_nhwc(x_nhwc, weight_oi11, stride, out_dtype=out_dtype)
    return jnp.transpose(out_nhwc, (0, 3, 1, 2))


if __name__ == "__main__":
    key = jax.random.PRNGKey(0)
    k_x, k_w = jax.random.split(key)

    in_planes, out_planes, stride = 4, 8, 2
    x = jax.random.normal(k_x, (2, in_planes, 16, 16), dtype=jnp.float32)
    weight = jax.random.normal(
        k_w, (out_planes, in_planes, 1, 1), dtype=jnp.float32
    ) * 0.1

    # Reference: strided 1x1 conv in plain JAX. Operands rounded to bf16 to
    # match the kernel's bf16 compute (fp32 accumulation).
    x_bf = x.astype(jnp.bfloat16).astype(jnp.float32)
    w_bf = weight.astype(jnp.bfloat16).astype(jnp.float32)
    ref = jnp.einsum(
        "nchw,oc->nohw", x_bf[:, :, ::stride, ::stride], w_bf[:, :, 0, 0]
    )

    # PyTorch-parity path (fp32 output, same dtype as input).
    fn = jax.jit(full_projection_shortcut, static_argnums=2)
    out = jax.block_until_ready(fn(x, weight, stride))
    assert out.shape == (2, out_planes, 8, 8), out.shape
    assert out.dtype == x.dtype, out.dtype
    assert jnp.allclose(out, ref, atol=5e-3, rtol=5e-3), float(
        jnp.max(jnp.abs(out - ref))
    )

    # bf16-output path (what a residual-add consumer should use): halves the
    # dominant output HBM stream.
    fn_bf16 = jax.jit(
        lambda a, b: full_projection_shortcut(a, b, stride, out_dtype=jnp.bfloat16)
    )
    out_bf16 = jax.block_until_ready(fn_bf16(x, weight))
    assert out_bf16.shape == (2, out_planes, 8, 8), out_bf16.shape
    assert out_bf16.dtype == jnp.bfloat16, out_bf16.dtype
    assert jnp.allclose(out_bf16.astype(jnp.float32), ref, atol=5e-2, rtol=5e-2), float(
        jnp.max(jnp.abs(out_bf16.astype(jnp.float32) - ref))
    )

    print("KERNEL_OK")
</pallas_src>

<mosaic_0001>
module attributes {stable_mosaic.version = 11 : i64} {
  func.func @_proj_matmul_kernel(%arg0: i32, %arg1: i32, %arg2: memref<128x4xbf16, #tpu.memory_space<vmem>>, %arg3: memref<4x128xbf16, #tpu.memory_space<vmem>>, %arg4: memref<128x128xf32, #tpu.memory_space<vmem>>) attributes {dimension_semantics = [#tpu.dimension_semantics<parallel>, #tpu.dimension_semantics<parallel>], iteration_bounds = array<i64: 1, 1>, scalar_prefetch = 0 : i64, scratch_operands = 0 : i64, tpu.core_type = #tpu.core_type<tc>, window_params = [{transform_indices = @transform_0, window_bounds = array<i64: 128, 4>}, {transform_indices = @transform_1, window_bounds = array<i64: 4, 128>}, {transform_indices = @transform_2, window_bounds = array<i64: 128, 128>}]} {
    %c0 = arith.constant 0 : index
    %c0_0 = arith.constant 0 : index
    %0 = vector.load %arg2[%c0, %c0_0] : memref<128x4xbf16, #tpu.memory_space<vmem>>, vector<128x4xbf16>
    %c0_1 = arith.constant 0 : index
    %c0_2 = arith.constant 0 : index
    %1 = vector.load %arg3[%c0_1, %c0_2] : memref<4x128xbf16, #tpu.memory_space<vmem>>, vector<4x128xbf16>
    %cst = arith.constant dense<0.000000e+00> : vector<128x128xf32>
    %2 = tpu.matmul %0, %1, %cst {dimension_numbers = #tpu.dot_dimension_numbers<[1], [0], [0], [1], [0, 0, 1, 1], [], []>} : vector<128x4xbf16>, vector<4x128xbf16>, vector<128x128xf32> -> vector<128x128xf32>
    %c0_3 = arith.constant 0 : index
    %c0_4 = arith.constant 0 : index
    %3 = vector.load %arg4[%c0_3, %c0_4] : memref<128x128xf32, #tpu.memory_space<vmem>>, vector<128x128xf32>
    tpu.vector_store %arg4[%c0_3, %c0_4], %2 {strides = array<i32>} : memref<128x128xf32, #tpu.memory_space<vmem>>, vector<128x128xf32>,
    return
  }
  func.func @transform_0(%arg0: i32, %arg1: i32) -> (i32, i32) {
    %c0_i32 = arith.constant 0 : i32
    %c0_i32_0 = arith.constant 0 : i32
    return %arg0, %c0_i32 : i32, i32
  }
  func.func @transform_1(%arg0: i32, %arg1: i32) -> (i32, i32) {
    %c0_i32 = arith.constant 0 : i32
    %c0_i32_0 = arith.constant 0 : i32
    return %c0_i32, %arg1 : i32, i32
  }
  func.func @transform_2(%arg0: i32, %arg1: i32) -> (i32, i32) {
    %c0_i32 = arith.constant 0 : i32
    return %arg0, %arg1 : i32, i32
  }
}

</mosaic_0001>

<llo_original>
// kernel: full_projection_shortcut.1
$region0: #{full_projection_shortcut.1}
  #allocation0 [shape = 'u32[]', space=smem, size = 0x4, offset = 0x4, fixed_abs, tag = 'smem constant byte address 0x4 - core index']
  #allocation1 [shape = 'u32[144,128]{1,0:T(1,128)}', space=vmem, size = 0x12000, scoped, tag = 'internal scratch']
  %s0 = inlined_call_operand.vmem [shape: bf16[128,4], index: 0, kind: input, shape index: {}]
  %s1 = inlined_call_operand.vmem [shape: bf16[4,128], index: 1, kind: input, shape index: {}]
  %s2 = inlined_call_operand.vmem [shape: f32[128,128], index: 2, kind: output, shape index: {}]
  %s3 = sld [smem:[#allocation0]]
  $region18: #{full_projection_shortcut.1} parent=0
    _
  %s5 = ssub.s32 1, %s3
  %s6 = scalar_select 0, %s5, %s3
  // Predicated region
  $region2: #{full_projection_shortcut.1} parent=0 // pred_check
    _
  $region3: #{full_projection_shortcut.1} parent=0 // pred_check_branch
    %8 = sbr.rel (0) target = $region5
  $region4: #{full_projection_shortcut.1} parent=0 // pred_region
    _
  $region5: #{full_projection_shortcut.1} parent=0 // pred_fallthru
    _
  // Predicated region
  $region6: #{full_projection_shortcut.1} parent=0 // pred_check
    _
  $region7: #{full_projection_shortcut.1} parent=0 // pred_check_branch
    %10 = sbr.rel (0) target = $region9
  $region8: #{full_projection_shortcut.1} parent=0 // pred_region
    _
  $region9: #{full_projection_shortcut.1} parent=0 // pred_fallthru
    _
  %v12 = vld [vmem:[%s0] sm:$0xf]
  %v13 = vld [vmem:[%s0 + $0x4] sm:$0xf]
  %v14 = vld [vmem:[%s0 + $0x8] sm:$0xf]
  %v15 = vld [vmem:[%s0 + $0xc] sm:$0xf]
  %v16 = vld [vmem:[%s0 + $0x10] sm:$0xf]
  %v17 = vld [vmem:[%s0 + $0x14] sm:$0xf]
  %v18 = vld [vmem:[%s0 + $0x18] sm:$0xf]
  %v19 = vld [vmem:[%s0 + $0x1c] sm:$0xf]
  %v20 = vld [vmem:[%s0 + $0x20] sm:$0xf]
  %v21 = vld [vmem:[%s0 + $0x24] sm:$0xf]
  %v22 = vld [vmem:[%s0 + $0x28] sm:$0xf]
  %v23 = vld [vmem:[%s0 + $0x2c] sm:$0xf]
  %v24 = vld [vmem:[%s0 + $0x30] sm:$0xf]
  %v25 = vld [vmem:[%s0 + $0x34] sm:$0xf]
  %v26 = vld [vmem:[%s0 + $0x38] sm:$0xf]
  %v27 = vld [vmem:[%s0 + $0x3c] sm:$0xf]
  %v28 = vld [vmem:[%s1] sm:$0x3]
  %v45 = vunpack.c.l.b16 %v12
  %v46 = vunpack.c.l.b16 %v13
  %v47 = vunpack.c.l.b16 %v14
  %v48 = vunpack.c.l.b16 %v15
  %v49 = vunpack.c.l.b16 %v16
  %v50 = vunpack.c.l.b16 %v17
  %v51 = vunpack.c.l.b16 %v18
  %v52 = vunpack.c.l.b16 %v19
  %v53 = vunpack.c.l.b16 %v20
  %v54 = vunpack.c.l.b16 %v21
  %v55 = vunpack.c.l.b16 %v22
  %v56 = vunpack.c.l.b16 %v23
  %v57 = vunpack.c.l.b16 %v24
  %v58 = vunpack.c.l.b16 %v25
  %v59 = vunpack.c.l.b16 %v26
  %v60 = vunpack.c.l.b16 %v27
  %v61 = vpack.c.b16 %v46, %v45
  %v62 = vpack.c.b16 %v48, %v47
  %v63 = vpack.c.b16 %v50, %v49
  %v64 = vpack.c.b16 %v52, %v51
  %v65 = vpack.c.b16 %v54, %v53
  %v66 = vpack.c.b16 %v56, %v55
  %v67 = vpack.c.b16 %v58, %v57
  %v68 = vpack.c.b16 %v60, %v59
  %vm69 = vcmask 31744
  %v71 = vsel %vm69, %v61, 0
  %v74 = vsel %vm69, %v62, 0
  %v77 = vsel %vm69, %v63, 0
  %v80 = vsel %vm69, %v64, 0
  %v83 = vsel %vm69, %v65, 0
  %v86 = vsel %vm69, %v66, 0
  %v89 = vsel %vm69, %v67, 0
  %v92 = vsel %vm69, %v68, 0
  %vm94 = vcmask 1041408
  %v96 = vsel %vm94, %v28, 0
  %98 = vmatprep.subr.bf16.mxu0 0
  %99 = vmatpush1.bf16.msra.mxu0 0
  %100 = vmatprep.subr.bf16.mxu0 0
  %101 = vmatpush1.bf16.msra.mxu0 0
  %102 = vmatprep.subr.bf16.mxu0 0
  %103 = vmatpush1.bf16.msra.mxu0 0
  %104 = vmatprep.subr.bf16.mxu0 0
  %105 = vmatpush1.bf16.msra.mxu0 0
  %106 = vmatprep.subr.bf16.mxu0 0
  %107 = vmatpush1.bf16.msra.mxu0 0
  %108 = vmatprep.subr.bf16.mxu0 0
  %109 = vmatpush1.bf16.msra.mxu0 0
  %110 = vmatprep.subr.bf16.mxu0 0
  %111 = vmatpush1.bf16.msra.mxu0 0
  %112 = vmatprep.subr.bf16.mxu0 0
  %113 = vmatpush1.bf16.msra.mxu0 %v96
  %114 = vmatprep.subr.bf16.mxu0 0
  %115 = vmatpush2.bf16.msra.mxu0 0
  %116 = vmatprep.subr.bf16.mxu0 0
  %117 = vmatpush2.bf16.msra.mxu0 0
  %118 = vmatprep.subr.bf16.mxu0 0
  %119 = vmatpush2.bf16.msra.mxu0 0
  %120 = vmatprep.subr.bf16.mxu0 0
  %121 = vmatpush2.bf16.msra.mxu0 0
  %122 = vmatprep.subr.bf16.mxu0 0
  %123 = vmatpush2.bf16.msra.mxu0 0
  %124 = vmatprep.subr.bf16.mxu0 0
  %125 = vmatpush2.bf16.msra.mxu0 0
  %126 = vmatprep.subr.bf16.mxu0 0
  %127 = vmatpush2.bf16.msra.mxu0 0
  %128 = vmatprep.subr.bf16.mxu0 0
  %129 = vmatpush2.bf16.msra.mxu0 0
  %130 = vmatprep.mubr.bf16.mxu0 0
  %131 = vmatmul.mubr.bf16.gmra.mxu0 %v71
  %v132 = vpop.f32.mrf.mxu0
  %v133 = vadd.f32 0.0, %v132
  %v134 = vpop.f32.mrf.mxu0
  %v135 = vpop.f32.mrf.mxu0
  %v136 = vadd.f32 0.0, %v135
  %v137 = vpop.f32.mrf.mxu0
  %138 = vmatprep.mubr.bf16.mxu0 0
  %139 = vmatmul.mubr.bf16.gmra.mxu0 %v74
  %v140 = vpop.f32.mrf.mxu0
  %v141 = vadd.f32 0.0, %v140
  %v142 = vpop.f32.mrf.mxu0
  %v143 = vpop.f32.mrf.mxu0
  %v144 = vadd.f32 0.0, %v143
  %v145 = vpop.f32.mrf.mxu0
  %146 = vmatprep.mubr.bf16.mxu0 0
  %147 = vmatmul.mubr.bf16.gmra.mxu0 %v77
  %v148 = vpop.f32.mrf.mxu0
  %v149 = vadd.f32 0.0, %v148
  %v150 = vpop.f32.mrf.mxu0
  %v151 = vpop.f32.mrf.mxu0
  %v152 = vadd.f32 0.0, %v151
  %v153 = vpop.f32.mrf.mxu0
  %154 = vmatprep.mubr.bf16.mxu0 0
  %155 = vmatmul.mubr.bf16.gmra.mxu0 %v80
  %v156 = vpop.f32.mrf.mxu0
  %v157 = vadd.f32 0.0, %v156
  %v158 = vpop.f32.mrf.mxu0
  %v159 = vpop.f32.mrf.mxu0
  %v160 = vadd.f32 0.0, %v159
  %v161 = vpop.f32.mrf.mxu0
  %162 = vmatprep.mubr.bf16.mxu0 0
  %163 = vmatmul.mubr.bf16.gmra.mxu0 %v83
  %v164 = vpop.f32.mrf.mxu0
  %v165 = vadd.f32 0.0, %v164
  %v166 = vpop.f32.mrf.mxu0
  %v167 = vpop.f32.mrf.mxu0
  %v168 = vadd.f32 0.0, %v167
  %v169 = vpop.f32.mrf.mxu0
  %170 = vmatprep.mubr.bf16.mxu0 0
  %171 = vmatmul.mubr.bf16.gmra.mxu0 %v86
  %v172 = vpop.f32.mrf.mxu0
  %v173 = vadd.f32 0.0, %v172
  %v174 = vpop.f32.mrf.mxu0
  %v175 = vpop.f32.mrf.mxu0
  %v176 = vadd.f32 0.0, %v175
  %v177 = vpop.f32.mrf.mxu0
  %178 = vmatprep.mubr.bf16.mxu0 0
  %179 = vmatmul.mubr.bf16.gmra.mxu0 %v89
  %v180 = vpop.f32.mrf.mxu0
  %v181 = vadd.f32 0.0, %v180
  %v182 = vpop.f32.mrf.mxu0
  %v183 = vpop.f32.mrf.mxu0
  %v184 = vadd.f32 0.0, %v183
  %v185 = vpop.f32.mrf.mxu0
  %186 = vmatprep.mubr.bf16.mxu0 0
  %187 = vmatmul.mubr.bf16.gmra.mxu0 %v92
  %v188 = vpop.f32.mrf.mxu0
  %v189 = vadd.f32 0.0, %v188
  %v190 = vpop.f32.mrf.mxu0
  %v191 = vpop.f32.mrf.mxu0
  %v192 = vadd.f32 0.0, %v191
  %v193 = vpop.f32.mrf.mxu0
  %194 = vdwg.mxu0
  %195 = vst [vmem:[%s2] sm:$0xff] %v133
  %196 = vst [vmem:[%s2 + $0x8] sm:$0xff] %v136
  %197 = vst [vmem:[%s2 + $0x10] sm:$0xff] %v141
  %198 = vst [vmem:[%s2 + $0x18] sm:$0xff] %v144
  %199 = vst [vmem:[%s2 + $0x20] sm:$0xff] %v149
  %200 = vst [vmem:[%s2 + $0x28] sm:$0xff] %v152
  %201 = vst [vmem:[%s2 + $0x30] sm:$0xff] %v157
  %202 = vst [vmem:[%s2 + $0x38] sm:$0xff] %v160
  %203 = vst [vmem:[%s2 + $0x40] sm:$0xff] %v165
  %204 = vst [vmem:[%s2 + $0x48] sm:$0xff] %v168
  %205 = vst [vmem:[%s2 + $0x50] sm:$0xff] %v173
  %206 = vst [vmem:[%s2 + $0x58] sm:$0xff] %v176
  %207 = vst [vmem:[%s2 + $0x60] sm:$0xff] %v181
  %208 = vst [vmem:[%s2 + $0x68] sm:$0xff] %v184
  %209 = vst [vmem:[%s2 + $0x70] sm:$0xff] %v189
  %210 = vst [vmem:[%s2 + $0x78] sm:$0xff] %v192
  // Predicated region
  $region10: #{full_projection_shortcut.1} parent=0 // pred_check
    _
  $region11: #{full_projection_shortcut.1} parent=0 // pred_check_branch
    %212 = sbr.rel (0) target = $region13
  $region12: #{full_projection_shortcut.1} parent=0 // pred_region
    _
  $region13: #{full_projection_shortcut.1} parent=0 // pred_fallthru
    _
  // Predicated region
  $region14: #{full_projection_shortcut.1} parent=0 // pred_check
    _
  $region15: #{full_projection_shortcut.1} parent=0 // pred_check_branch
    %214 = sbr.rel (0) target = $region17
  $region16: #{full_projection_shortcut.1} parent=0 // pred_region
    _
  $region17: #{full_projection_shortcut.1} parent=0 // pred_fallthru
    _

</llo_original>
